<compile_context>
chip_gen: v7x
topology: tpu7x:2x2x1
jax: 0.10.0
libtpu: 0.0.40
codegen_flags: <defaults>
</compile_context>

<pallas_src>
import functools

import jax
import jax.numpy as jnp
from jax.experimental import pallas as pl
from jax.experimental.pallas import tpu as pltpu


def _round_up(a: int, b: int) -> int:
    return (a + b - 1) // b * b


def build_gcn_adj_padded(edge_index, edge_weight, n, nm, nk, out_dtype):
    """PyG gcn_norm, densified straight into the kernel-padded (nm, nk) buffer.

    add_remaining_self_loops (fill=1, existing self-loop weight preserved) then
    D^-1/2 (A+I) D^-1/2.  Message passing does out[col] += norm * x[row], so the
    dense operator is A_hat[col, row] = norm and the aggregation is A_hat @ x.
    The scatter is done in f32 (duplicate parallel edges accumulate exactly) and
    the result is cast to `out_dtype` once, with the zero-pad fused in.
    """
    row, col = edge_index[0], edge_index[1]
    w_dtype = edge_weight.dtype
    is_loop = row == col

    # add_remaining_self_loops: every node gets a self-loop of weight 1 unless it
    # already has one, in which case its existing weight is kept (for duplicate
    # self-loops the last write wins, matching PyG's index_put semantics).
    loop_w = jnp.ones((n,), w_dtype)
    loop_w = loop_w.at[jnp.where(is_loop, row, n)].set(edge_weight, mode="drop")
    ew = jnp.where(is_loop, jnp.zeros((), w_dtype), edge_weight)  # drop loop edges

    loop = jnp.arange(n, dtype=row.dtype)
    row_all = jnp.concatenate([row, loop])
    col_all = jnp.concatenate([col, loop])
    ew_all = jnp.concatenate([ew, loop_w])

    deg = jnp.zeros((n,), w_dtype).at[col_all].add(ew_all)
    dinv = jnp.where(deg > 0, jax.lax.rsqrt(deg), 0.0)
    norm = dinv[row_all] * ew_all * dinv[col_all]

    # Scatter directly into the padded buffer (padded rows/cols stay zero and
    # contribute nothing to the aggregation), then cast once.
    A = jnp.zeros((nm, nk), w_dtype).at[col_all, row_all].add(norm)
    return A.astype(out_dtype)


def _agg_kernel_resident_x(a_ref, x_ref, o_ref, *, tk):
    """A_hat (TM, TK) block times the k-th (TK, F_pad) slice of the fully
    VMEM-resident x, accumulated directly into the k-resident f32 output block."""
    k = pl.program_id(1)

    @pl.when(k == 0)
    def _():
        o_ref[...] = jnp.zeros_like(o_ref)

    start = pl.multiple_of(k * tk, tk)
    o_ref[...] += jnp.dot(a_ref[...], x_ref[pl.ds(start, tk), :],
                          preferred_element_type=jnp.float32)


def _agg_kernel_streamed_x(a_ref, x_ref, o_ref):
    """Same as above, but x arrives as streamed (TK, F_pad) blocks."""
    @pl.when(pl.program_id(1) == 0)
    def _():
        o_ref[...] = jnp.zeros_like(o_ref)

    o_ref[...] += jnp.dot(a_ref[...], x_ref[...],
                          preferred_element_type=jnp.float32)


def modelfree_gcn_forward(x, edge_index, edge_weight, *, use_bf16=True):
    """ModelfreeGCN.forward: the GCNConv linear weight is forced to identity and
    bias=False, so the module output is exactly the normalized aggregation."""
    n, f = x.shape
    in_dtype = jnp.bfloat16 if use_bf16 else jnp.float32
    bytes_in = 2 if use_bf16 else 4
    tm_align = 16 if use_bf16 else 8  # native sublane packing of the operand dtype

    # Large tiles: per-step DMA/MXU work must dwarf the ~0.35 us grid-step
    # overhead.  TM on the "parallel" row axis (so N >= 1024 gives >= 2 row
    # blocks for v7x's 2 TensorCores), TK on the "arbitrary" reduction axis.
    TM = min(512, _round_up(n, tm_align))
    TK = min(2048, _round_up(n, 128))
    F_pad = _round_up(f, 128)           # lane-dense output stores
    NM = _round_up(n, TM)
    NK = _round_up(n, TK)
    grid = (NM // TM, NK // TK)

    # Build the padded bf16 A_hat directly (scatter in f32, single cast) and the
    # padded x in the matmul operand dtype.  Accumulation stays f32 on the MXU.
    A_p = build_gcn_adj_padded(edge_index, edge_weight, n, NM, NK, in_dtype)
    x_p = jnp.zeros((NK, F_pad), in_dtype).at[:n, :f].set(x.astype(in_dtype))

    # Keep the whole (padded) x VMEM-resident when it is small enough, so it is
    # fetched from HBM once instead of once per row block.
    x_bytes = NK * F_pad * bytes_in
    x_resident = x_bytes <= 8 * 2**20
    if x_resident:
        kernel = functools.partial(_agg_kernel_resident_x, tk=TK)
        x_spec = pl.BlockSpec((NK, F_pad), lambda i, k: (0, 0))
        x_vmem = 2 * x_bytes
    else:
        kernel = _agg_kernel_streamed_x
        x_spec = pl.BlockSpec((TK, F_pad), lambda i, k: (k, 0))
        x_vmem = 2 * TK * F_pad * bytes_in

    vmem_need = (2 * TM * TK * bytes_in   # A blocks, double buffered
                 + x_vmem                 # x (resident or streamed blocks)
                 + 2 * TM * F_pad * 4)    # f32 output block (k-resident accumulator)
    # Cap well below v7x's 64 MiB per-TC VMEM; floor gives Pallas internals room.
    vmem_limit = int(min(48 * 2**20, max(16 * 2**20, 2 * vmem_need)))

    out = pl.pallas_call(
        kernel,
        out_shape=jax.ShapeDtypeStruct((NM, F_pad), jnp.float32),
        grid_spec=pltpu.PrefetchScalarGridSpec(
            num_scalar_prefetch=0,
            grid=grid,
            in_specs=[
                pl.BlockSpec((TM, TK), lambda i, k: (i, k)),  # A_hat row block
                x_spec,                                       # x (resident or streamed)
            ],
            out_specs=pl.BlockSpec((TM, F_pad), lambda i, k: (i, 0)),
        ),
        compiler_params=pltpu.CompilerParams(
            dimension_semantics=("parallel", "arbitrary"),
            vmem_limit_bytes=vmem_limit,
        ),
    )(A_p, x_p)

    return out[:n, :f]


if __name__ == "__main__":
    key = jax.random.PRNGKey(0)
    N, F, E = 8, 4, 16
    k1, k2, k3 = jax.random.split(key, 3)

    x = jax.random.normal(k1, (N, F), jnp.float32)
    edge_index = jax.random.randint(k2, (2, E), 0, N)
    edge_weight = jax.random.uniform(k3, (E,), jnp.float32, minval=0.5, maxval=1.5)

    h = modelfree_gcn_forward(x, edge_index, edge_weight)
    jax.block_until_ready(h)

    assert h.shape == (N, F)

    # Sanity check against the plain-JAX f32 reference (loose tolerance: the
    # kernel uses bf16 matmul operands with f32 accumulation).
    A_ref = build_gcn_adj_padded(edge_index, edge_weight, N, N, N, jnp.float32)
    ref = A_ref @ x
    assert jnp.allclose(h, ref, atol=0.1, rtol=0.1)

    print("KERNEL_OK")
</pallas_src>

<mosaic_0001>
module attributes {stable_mosaic.version = 11 : i64} {
  func.func @_agg_kernel_resident_x(%arg0: i32, %arg1: i32, %arg2: memref<16x128xbf16, #tpu.memory_space<vmem>>, %arg3: memref<128x128xbf16, #tpu.memory_space<vmem>>, %arg4: memref<16x128xf32, #tpu.memory_space<vmem>>) attributes {dimension_semantics = [#tpu.dimension_semantics<parallel>, #tpu.dimension_semantics<arbitrary>], iteration_bounds = array<i64: 1, 1>, scalar_prefetch = 0 : i64, scratch_operands = 0 : i64, tpu.core_type = #tpu.core_type<tc>, window_params = [{transform_indices = @transform_0, window_bounds = array<i64: 16, 128>}, {pipeline_mode = #tpu.pipeline_mode<synchronous>, transform_indices = @transform_1, window_bounds = array<i64: 128, 128>}, {transform_indices = @transform_2, window_bounds = array<i64: 16, 128>}]} {
    %c0_i32 = arith.constant 0 : i32
    %0 = arith.cmpi eq, %arg1, %c0_i32 : i32
    %1 = arith.extui %0 : i1 to i32
    %c0_i32_0 = arith.constant 0 : i32
    %2 = arith.cmpi ne, %1, %c0_i32_0 : i32
    scf.if %2 {
      %cst_7 = arith.constant 0.000000e+00 : f32
      %12 = vector.broadcast %cst_7 : f32 to vector<16x128xf32>
      %c0_8 = arith.constant 0 : index
      %c0_9 = arith.constant 0 : index
      %13 = vector.load %arg4[%c0_8, %c0_9] : memref<16x128xf32, #tpu.memory_space<vmem>>, vector<16x128xf32>
      tpu.vector_store %arg4[%c0_8, %c0_9], %12 {strides = array<i32>} : memref<16x128xf32, #tpu.memory_space<vmem>>, vector<16x128xf32>,
    } else {
    }
    %c128_i32 = arith.constant 128 : i32
    %3 = arith.muli %arg1, %c128_i32 : i32
    %4 = tpu.assume_multiple %3, 128 : i32
    %c0 = arith.constant 0 : index
    %c0_1 = arith.constant 0 : index
    %5 = vector.load %arg4[%c0, %c0_1] : memref<16x128xf32, #tpu.memory_space<vmem>>, vector<16x128xf32>
    %c0_2 = arith.constant 0 : index
    %c0_3 = arith.constant 0 : index
    %6 = vector.load %arg2[%c0_2, %c0_3] : memref<16x128xbf16, #tpu.memory_space<vmem>>, vector<16x128xbf16>
    %7 = arith.index_cast %4 : i32 to index
    %c0_4 = arith.constant 0 : index
    %8 = vector.load %arg3[%7, %c0_4] : memref<128x128xbf16, #tpu.memory_space<vmem>>, vector<128x128xbf16>
    %cst = arith.constant dense<0.000000e+00> : vector<16x128xf32>
    %9 = tpu.matmul %6, %8, %cst {dimension_numbers = #tpu.dot_dimension_numbers<[1], [0], [0], [1], [0, 0, 1, 1], [], []>} : vector<16x128xbf16>, vector<128x128xbf16>, vector<16x128xf32> -> vector<16x128xf32>
    %10 = arith.addf %5, %9 : vector<16x128xf32>
    %c0_5 = arith.constant 0 : index
    %c0_6 = arith.constant 0 : index
    %11 = vector.load %arg4[%c0_5, %c0_6] : memref<16x128xf32, #tpu.memory_space<vmem>>, vector<16x128xf32>
    tpu.vector_store %arg4[%c0_5, %c0_6], %10 {strides = array<i32>} : memref<16x128xf32, #tpu.memory_space<vmem>>, vector<16x128xf32>,
    return
  }
  func.func @transform_0(%arg0: i32, %arg1: i32) -> (i32, i32) {
    %c0_i32 = arith.constant 0 : i32
    return %arg0, %arg1 : i32, i32
  }
  func.func @transform_1(%arg0: i32, %arg1: i32) -> (i32, i32) {
    %c0_i32 = arith.constant 0 : i32
    %c0_i32_0 = arith.constant 0 : i32
    %c0_i32_1 = arith.constant 0 : i32
    return %c0_i32, %c0_i32_0 : i32, i32
  }
  func.func @transform_2(%arg0: i32, %arg1: i32) -> (i32, i32) {
    %c0_i32 = arith.constant 0 : i32
    %c0_i32_0 = arith.constant 0 : i32
    return %arg0, %c0_i32 : i32, i32
  }
}

</mosaic_0001>

<llo_original>
// kernel: tpu_custom_call.1
$region0: #{tpu_custom_call.1}
  #allocation0 [shape = 'u32[]', space=smem, size = 0x4, offset = 0x4, fixed_abs, tag = 'smem constant byte address 0x4 - core index']
  #allocation1 [shape = 'u32[144,128]{1,0:T(1,128)}', space=vmem, size = 0x12000, scoped, tag = 'internal scratch']
  %s0 = inlined_call_operand.hbm [shape: bf16[16,128], index: 0, kind: input, shape index: {}]
  %s1 = inlined_call_operand.hbm [shape: bf16[128,128], index: 1, kind: input, shape index: {}]
  %s2 = inlined_call_operand.hbm [shape: f32[16,128], index: 2, kind: output, shape index: {}]
  %s3 = sld [smem:[#allocation0]]
  $region30: #{tpu_custom_call.1} parent=0
    _
  %s5 = ssub.s32 1, %s3
  %s6 = scalar_select 0, %s5, %s3
  $region1: #{tpu_custom_call.1} parent=0
    #allocation2 [shape = 'u8[4096]{0}', space=vmem, size = 0x1000, scoped, tag = 'input window, operand 0, single buffered']
    #allocation3 [shape = 's32[1]{0}', space=sflag, size = 0x4, scoped, tag = 'scoped memory for tpu_custom_call.1']
    #allocation4 [shape = 's32[1]{0}', space=sflag, size = 0x4, scoped, tag = 'scoped memory for tpu_custom_call.1']
    #allocation5 [shape = 'u8[32768]{0}', space=vmem, size = 0x8000, scoped, tag = 'input window, operand 1, single buffered']
    #allocation6 [shape = 's32[1]{0}', space=sflag, size = 0x4, scoped, tag = 'scoped memory for tpu_custom_call.1']
    #allocation7 [shape = 'u8[8192]{0}', space=vmem, size = 0x2000, scoped, tag = 'output window, operand 0, single buffered']
    %7 = vsyncpa [#allocation3], 0
    %8 = vsyncpa [#allocation6], 0
    %9 = vsyncpa [#allocation4], 0
    // Predicated region
    $region2: #{tpu_custom_call.1} parent=1 // pred_check
      _
    $region3: #{tpu_custom_call.1} parent=1 // pred_check_branch
      %11 = sbr.rel (0) target = $region5
    $region4: #{tpu_custom_call.1} parent=1 // pred_region
      %s13 = ssub.s32 128, 128
      %14 = vsyncadd [#allocation3], %s13
      %s15 = sshll.u32 [#allocation2], 4
      %s16 = int_to_ptr.vmem [resolvable:$true] %s15
      %21 = dma.hbm_to_vmem [thread:$0]  %s0, 128, %s16, [#allocation3], 64, 64, 4
    $region5: #{tpu_custom_call.1} parent=1 // pred_fallthru
      _
    // Predicated region
    $region6: #{tpu_custom_call.1} parent=1 // pred_check
      _
    $region7: #{tpu_custom_call.1} parent=1 // pred_check_branch
      %23 = sbr.rel (0) target = $region9
    $region8: #{tpu_custom_call.1} parent=1 // pred_region
      %s25 = ssub.s32 1024, 1024
      %26 = vsyncadd [#allocation6], %s25
      %s27 = sshll.u32 [#allocation5], 4
      %s28 = int_to_ptr.vmem [resolvable:$true] %s27
      %33 = dma.hbm_to_vmem [thread:$0]  %s1, 1024, %s28, [#allocation6], 64, 64, 4
    $region9: #{tpu_custom_call.1} parent=1 // pred_fallthru
      _
    // Predicated region
    $region10: #{tpu_custom_call.1} parent=1 // pred_check
      _
    $region11: #{tpu_custom_call.1} parent=1 // pred_check_branch
      %35 = sbr.rel (0) target = $region13
    $region12: #{tpu_custom_call.1} parent=1 // pred_region
      %36 = dma.done [#allocation3], 128
    $region13: #{tpu_custom_call.1} parent=1 // pred_fallthru
      _
    // Predicated region
    $region14: #{tpu_custom_call.1} parent=1 // pred_check
      _
    $region15: #{tpu_custom_call.1} parent=1 // pred_check_branch
      %38 = sbr.rel (0) target = $region17
    $region16: #{tpu_custom_call.1} parent=1 // pred_region
      %39 = dma.done [#allocation6], 1024
    $region17: #{tpu_custom_call.1} parent=1 // pred_fallthru
      _
    %p41 = scmp.eq.s32.totalorder 0, 0
    // Predicated region
    $region18: #{tpu_custom_call.1} parent=1 // pred_check
      %p42 = pneg %p41
    $region19: #{tpu_custom_call.1} parent=1 // pred_check_branch
      %44 = sbr.rel (%p42) target = $region21
    $region20: #{tpu_custom_call.1} parent=1 // pred_region
      %45 = vst [vmem:[#allocation7] sm:$0xff] 0.0
      %46 = vst [vmem:[#allocation7 + $0x8] sm:$0xff] 0.0
    $region21: #{tpu_custom_call.1} parent=1 // pred_fallthru
      _
    %s47 = smul.u32 0, 128
    %v48 = vld [vmem:[#allocation7] sm:$0xff]
    %v49 = vld [vmem:[#allocation7 + $0x8] sm:$0xff]
    %v50 = vld [vmem:[#allocation2] sm:$0xf]
    %v51 = vld [vmem:[#allocation2 + $0x4] sm:$0xf]
    %s52 = sshra.s32 %s47, 3
    %s53 = sand.u32 %s47, 7
    %s54 = smul.addr %s52, 4
    %s55 = scalar_lea.vmem [#allocation5], %s54
    %v56 = vld [vmem:[%s55] sm:$0xf]
    %v57 = vld [vmem:[%s55 + $0x4] sm:$0xf]
    %v58 = vld [vmem:[%s55 + $0x8] sm:$0xf]
    %v59 = vld [vmem:[%s55 + $0xc] sm:$0xf]
    %v60 = vld [vmem:[%s55 + $0x10] sm:$0xf]
    %v61 = vld [vmem:[%s55 + $0x14] sm:$0xf]
    %v62 = vld [vmem:[%s55 + $0x18] sm:$0xf]
    %v63 = vld [vmem:[%s55 + $0x1c] sm:$0xf]
    %v64 = vld [vmem:[%s55 + $0x20] sm:$0xf]
    %v65 = vld [vmem:[%s55 + $0x24] sm:$0xf]
    %v66 = vld [vmem:[%s55 + $0x28] sm:$0xf]
    %v67 = vld [vmem:[%s55 + $0x2c] sm:$0xf]
    %v68 = vld [vmem:[%s55 + $0x30] sm:$0xf]
    %v69 = vld [vmem:[%s55 + $0x34] sm:$0xf]
    %v70 = vld [vmem:[%s55 + $0x38] sm:$0xf]
    %v71 = vld [vmem:[%s55 + $0x3c] sm:$0xf]
    %v74 = vunpack.c.l.b16 %v50
    %v75 = vunpack.c.l.b16 %v51
    %v76 = vpack.c.b16 %v75, %v74
    %v94 = vunpack.c.l.b16 %v56
    %v95 = vunpack.c.l.b16 %v57
    %v96 = vunpack.c.l.b16 %v58
    %v97 = vunpack.c.l.b16 %v59
    %v98 = vunpack.c.l.b16 %v60
    %v99 = vunpack.c.l.b16 %v61
    %v100 = vunpack.c.l.b16 %v62
    %v101 = vunpack.c.l.b16 %v63
    %v102 = vunpack.c.l.b16 %v64
    %v103 = vunpack.c.l.b16 %v65
    %v104 = vunpack.c.l.b16 %v66
    %v105 = vunpack.c.l.b16 %v67
    %v106 = vunpack.c.l.b16 %v68
    %v107 = vunpack.c.l.b16 %v69
    %v108 = vunpack.c.l.b16 %v70
    %v109 = vunpack.c.l.b16 %v71
    %v110 = vpack.c.b16 %v95, %v94
    %v111 = vpack.c.b16 %v97, %v96
    %v112 = vpack.c.b16 %v99, %v98
    %v113 = vpack.c.b16 %v101, %v100
    %v114 = vpack.c.b16 %v103, %v102
    %v115 = vpack.c.b16 %v105, %v104
    %v116 = vpack.c.b16 %v107, %v106
    %v117 = vpack.c.b16 %v109, %v108
    %126 = vmatprep.subr.bf16.mxu0 0
    %127 = vmatpush1.bf16.msra.mxu0 %v110
    %128 = vmatprep.subr.bf16.mxu0 0
    %129 = vmatpush1.bf16.msra.mxu0 %v111
    %130 = vmatprep.subr.bf16.mxu0 0
    %131 = vmatpush1.bf16.msra.mxu0 %v112
    %132 = vmatprep.subr.bf16.mxu0 0
    %133 = vmatpush1.bf16.msra.mxu0 %v113
    %134 = vmatprep.subr.bf16.mxu0 0
    %135 = vmatpush1.bf16.msra.mxu0 %v114
    %136 = vmatprep.subr.bf16.mxu0 0
    %137 = vmatpush1.bf16.msra.mxu0 %v115
    %138 = vmatprep.subr.bf16.mxu0 0
    %139 = vmatpush1.bf16.msra.mxu0 %v116
    %140 = vmatprep.subr.bf16.mxu0 0
    %141 = vmatpush1.bf16.msra.mxu0 %v117
    %142 = vmatprep.subr.bf16.mxu0 0
    %143 = vmatpush1.bf16.msra.mxu0 0
    %144 = vmatprep.subr.bf16.mxu0 0
    %145 = vmatpush1.bf16.msra.mxu0 0
    %146 = vmatprep.subr.bf16.mxu0 0
    %147 = vmatpush1.bf16.msra.mxu0 0
    %148 = vmatprep.subr.bf16.mxu0 0
    %149 = vmatpush1.bf16.msra.mxu0 0
    %150 = vmatprep.subr.bf16.mxu0 0
    %151 = vmatpush1.bf16.msra.mxu0 0
    %152 = vmatprep.subr.bf16.mxu0 0
    %153 = vmatpush1.bf16.msra.mxu0 0
    %154 = vmatprep.subr.bf16.mxu0 0
    %155 = vmatpush1.bf16.msra.mxu0 0
    %156 = vmatprep.subr.bf16.mxu0 0
    %157 = vmatpush1.bf16.msra.mxu0 0
    %158 = vmatprep.mubr.bf16.mxu0 0
    %159 = vmatmul.mubr.bf16.gmra.mrb[0].mxu0 %v76
    %v160 = vpop.f32.mrb[0].mxu0
    %v161 = vadd.f32 0.0, %v160
    %v162 = vpop.f32.mrb[0].mxu0
    %v163 = vpop.f32.mrb[0].mxu0
    %v164 = vadd.f32 0.0, %v163
    %v165 = vpop.f32.mrb[0].mxu0
    %166 = vdwg.mxu0
    %v167 = vadd.f32 %v48, %v161
    %v168 = vadd.f32 %v49, %v164
    %169 = vst [vmem:[#allocation7] sm:$0xff] %v167
    %170 = vst [vmem:[#allocation7 + $0x8] sm:$0xff] %v168
    // Predicated region
    $region22: #{tpu_custom_call.1} parent=1 // pred_check
      _
    $region23: #{tpu_custom_call.1} parent=1 // pred_check_branch
      %172 = sbr.rel (0) target = $region25
    $region24: #{tpu_custom_call.1} parent=1 // pred_region
      %s174 = ssub.s32 256, 256
      %175 = vsyncadd [#allocation4], %s174
      %s176 = sshll.u32 [#allocation7], 4
      %s177 = int_to_ptr.vmem [resolvable:$true] %s176
      %182 = dma.vmem_to_hbm [thread:$0]  %s177, 256, %s2, [#allocation4], 128, 128, 8
    $region25: #{tpu_custom_call.1} parent=1 // pred_fallthru
      _
    // Predicated region
    $region26: #{tpu_custom_call.1} parent=1 // pred_check
      _
    $region27: #{tpu_custom_call.1} parent=1 // pred_check_branch
      %184 = sbr.rel (0) target = $region29
    $region28: #{tpu_custom_call.1} parent=1 // pred_region
      %185 = dma.done [#allocation4], 256
    $region29: #{tpu_custom_call.1} parent=1 // pred_fallthru
      _
    %186 = vsyncpa [#allocation3], 1
    %187 = vsyncpa [#allocation6], 1
    %188 = vsyncpa [#allocation4], 1

</llo_original>
